<compile_context>
chip_gen: v5e
topology: v5e:2x2
jax: 0.10.0
libtpu: 0.0.40
codegen_flags: <defaults>
</compile_context>

<pallas_src>
import functools
import math

import jax
import jax.numpy as jnp
from jax.experimental import pallas as pl
from jax.experimental.pallas import tpu as pltpu

K_ATTN = 64  # self.k = 64 in the PyTorch module


# ----------------------------------------------------------------------------
# Kernels
# ----------------------------------------------------------------------------
def _fused_kernel(x_ref, a_ref, a0_ref, w2_ref, shift_ref, o_ref):
    """Single-pass External_attention for one batch element whose (C, N) slab fits VMEM.

    x_ref    : (C, N) f32   full feature slab (channels x pixels)
    a_ref    : (K, C) bf16  fused conv1 -> linear_0 weight
    a0_ref   : (K, 1) f32   conv1 bias projected through linear_0
    w2_ref   : (C, K) bf16  fused linear_1 -> conv2 -> BN-scale weight
    shift_ref: (C, 1) f32   folded BN shift
    o_ref    : (C, N) f32   relu(W2eff @ attn + shift + x)
    """
    x = x_ref[...]
    x_bf = x.astype(jnp.bfloat16)

    logits = jnp.dot(a_ref[...], x_bf, preferred_element_type=jnp.float32) + a0_ref[...]

    # softmax over N (PyTorch dim=-1); denominator reciprocal on the EUP.
    m = jnp.max(logits, axis=1, keepdims=True)
    p = jnp.exp(logits - m)
    attn = p * pl.reciprocal(jnp.sum(p, axis=1, keepdims=True), approx=True)
    # normalization over k (PyTorch dim=1): attn / (1e-9 + attn.sum(dim=1))
    ksum = jnp.sum(attn, axis=0, keepdims=True)
    attn = attn * pl.reciprocal(ksum + 1e-9, approx=True)

    # fused linear_1 -> conv2 -> BatchNorm (scale folded into w2, shift added here) + residual
    z = jnp.dot(w2_ref[...], attn.astype(jnp.bfloat16), preferred_element_type=jnp.float32)
    o_ref[...] = jnp.maximum(z + shift_ref[...] + x, 0.0).astype(o_ref.dtype)


def _stats_kernel(x_ref, a_ref, a0_ref, m_ref, l_ref, *, tn, n_true, masked):
    """Streaming pass 1: online softmax statistics over the spatial axis N.

    Grid is (k_split, batch, n_tiles); the body sees a (K/2, C) slice of A and one N tile.
    m_ref/l_ref are resident across the tile axis (running max / sum of exp).
    """
    ti = pl.program_id(2)

    @pl.when(ti == 0)
    def _init():
        m_ref[...] = jnp.full(m_ref.shape, -jnp.inf, m_ref.dtype)
        l_ref[...] = jnp.zeros(l_ref.shape, l_ref.dtype)

    x_bf = x_ref[...].astype(jnp.bfloat16)
    logits = jnp.dot(a_ref[...], x_bf, preferred_element_type=jnp.float32) + a0_ref[...]

    if masked:
        # padded spatial columns (global col >= n_true) must not contribute to the softmax
        col = ti * tn + jax.lax.broadcasted_iota(jnp.int32, logits.shape, 1)
        logits = jnp.where(col < n_true, logits, -jnp.inf)

    m_old = m_ref[...]
    m_new = jnp.maximum(m_old, jnp.max(logits, axis=1, keepdims=True))
    p = jnp.exp(logits - m_new)
    l_ref[...] = l_ref[...] * jnp.exp(m_old - m_new) + jnp.sum(p, axis=1, keepdims=True)
    m_ref[...] = m_new


def _apply_kernel(m_ref, l_ref, x_ref, a_ref, a0_ref, w2_ref, shift_ref, o_ref):
    """Streaming pass 2: softmax apply + k-normalization + fused projection + residual ReLU.

    Padded columns produce garbage that is sliced off on the host; they cannot contaminate
    valid columns because the softmax denominator (l) already excludes them and the
    k-normalization is per-column.
    """
    x = x_ref[...]
    x_bf = x.astype(jnp.bfloat16)

    logits = jnp.dot(a_ref[...], x_bf, preferred_element_type=jnp.float32) + a0_ref[...]
    attn = jnp.exp(logits - m_ref[...]) * pl.reciprocal(l_ref[...], approx=True)
    ksum = jnp.sum(attn, axis=0, keepdims=True)
    attn = attn * pl.reciprocal(ksum + 1e-9, approx=True)

    z = jnp.dot(w2_ref[...], attn.astype(jnp.bfloat16), preferred_element_type=jnp.float32)
    o_ref[...] = jnp.maximum(z + shift_ref[...] + x, 0.0).astype(o_ref.dtype)


# ----------------------------------------------------------------------------
# Generation-aware VMEM budgeting
# ----------------------------------------------------------------------------
def _vmem_capacity_bytes():
    """Physical VMEM of the current chip; conservative v7x default if the query fails."""
    try:
        cap = int(pltpu.get_tpu_info().vmem_capacity_bytes)
        if cap > 0:
            return cap
    except Exception:
        pass
    return 64 << 20


def _fused_footprint_bytes(c, n, k):
    # double-buffered f32 x/out blocks + resident intermediates
    # (bf16 x copy, f32 logits & p, bf16 attn, f32 z)
    return n * (16 * c + 2 * c + 4 * c + (4 + 4 + 2) * k)


def _fused_vmem_limit(c, n, k, cap):
    hi = max((5 * cap) // 8, 16 << 20)
    need = _fused_footprint_bytes(c, n, k) + (4 << 20)
    return int(min(max(need, 16 << 20), hi))


def _pick_tile_n(n, c, budget_bytes):
    """Largest 128-multiple spatial tile within the per-generation VMEM budget."""
    per_col = (10 * c + 6 * K_ATTN) * 4          # rough live bytes per spatial column
    cap_cols = max(128, (budget_bytes // per_col) // 128 * 128)
    cap_cols = min(cap_cols, 8192)
    n_up = ((n + 127) // 128) * 128
    tn = min(cap_cols, n_up)
    nt = -(-n // tn)                              # ceil
    return tn, nt


def _vmem_limit_bytes(c, k, tn, cap):
    col = tn * 4
    need = (
        4 * c * col                  # x tile, double-buffered
        + 4 * c * col                # out tile, double-buffered
        + 3 * c * col                # bf16 copy of x, z, headroom
        + 4 * k * col                # logits / attn (f32 + bf16 copies)
        + 8 * (2 * k * c + k + c)    # weights & biases (double-buffered, tiny)
    ) + (2 << 20)
    hi = max((5 * cap) // 8, 16 << 20)
    return int(min(max(need, 16 << 20), hi))


# ----------------------------------------------------------------------------
# Wrapper
# ----------------------------------------------------------------------------
def external_attention(x_nchw, params, *, force_two_pass=False, max_tile_n=None):
    """x_nchw: (B, C, H, W) float32. Returns (B, C, H, W), matching External_attention.forward."""
    b, c, h, w = x_nchw.shape
    n = h * w
    k = K_ATTN

    # (B, C, H, W) -> (B, C, N): contiguous reshape, no transpose (N sits in lanes).
    x3 = x_nchw.reshape(b, c, n)

    # Host-side folding of the pointwise linear chain (exact up to f32 rounding).
    eps = 1e-5
    bn_scale = params["bn_gamma"] / jnp.sqrt(params["bn_var"] + eps)
    bn_shift = params["bn_beta"] - params["bn_mean"] * bn_scale

    a_mat = params["linear0_w"] @ params["conv1_w"]                        # (K, C)
    a0 = (params["linear0_w"] @ params["conv1_b"]).reshape(k, 1)           # (K, 1)
    w2eff = (bn_scale[:, None] * params["conv2_w"]) @ params["linear1_w"]  # (C, K)
    shift = bn_shift.reshape(c, 1)                                         # (C, 1)

    a_bf = a_mat.astype(jnp.bfloat16)
    w2_bf = w2eff.astype(jnp.bfloat16)
    a0 = a0.astype(jnp.float32)
    shift = shift.astype(jnp.float32)

    cap = _vmem_capacity_bytes()

    # ---------------- fused single-pass path (x read once, exp computed once) -----------
    if (not force_two_pass) and _fused_footprint_bytes(c, n, k) <= (3 * cap) // 8:
        slab_spec = pl.BlockSpec((None, c, n), lambda bi: (bi, 0, 0))
        out = pl.pallas_call(
            _fused_kernel,
            out_shape=jax.ShapeDtypeStruct((b, c, n), jnp.float32),
            grid=(b,),
            in_specs=[
                slab_spec,
                pl.BlockSpec((k, c), lambda bi: (0, 0)),
                pl.BlockSpec((k, 1), lambda bi: (0, 0)),
                pl.BlockSpec((c, k), lambda bi: (0, 0)),
                pl.BlockSpec((c, 1), lambda bi: (0, 0)),
            ],
            out_specs=slab_spec,
            compiler_params=pltpu.CompilerParams(
                dimension_semantics=("parallel",),
                vmem_limit_bytes=_fused_vmem_limit(c, n, k, cap),
            ),
            cost_estimate=pl.CostEstimate(
                flops=4 * b * n * k * c,
                transcendentals=b * n * k,
                bytes_accessed=2 * b * c * n * 4 + 4 * k * c + 4 * (k + c),
            ),
        )(x3, a_bf, a0, w2_bf, shift)
        return out.reshape(b, c, h, w)

    # ---------------- streaming two-pass path for large feature maps --------------------
    tn_budget = (12 << 20) if cap <= (64 << 20) else (28 << 20)
    tn, nt = _pick_tile_n(n, c, tn_budget)
    if max_tile_n is not None:                    # test hook: force multi-tile streaming
        tn = min(tn, max(128, (max_tile_n // 128) * 128))
        nt = -(-n // tn)
    n_pad = tn * nt
    x_p = x3 if n_pad == n else jnp.pad(x3, ((0, 0), (0, 0), (0, n_pad - n)))

    vmem_limit = _vmem_limit_bytes(c, k, tn, cap)
    kh = k // 2    # split K=64 into 2x32 across a leading parallel axis (v7x megacore at B=1)

    x_spec3 = pl.BlockSpec((None, c, tn), lambda ci, bi, ti: (bi, 0, ti))
    stat_out_spec = pl.BlockSpec((None, kh, 1), lambda ci, bi, ti: (bi, ci, 0))

    stats_fn = functools.partial(_stats_kernel, tn=tn, n_true=n, masked=(n_pad != n))
    m_stats, l_stats = pl.pallas_call(
        stats_fn,
        out_shape=(jax.ShapeDtypeStruct((b, k, 1), jnp.float32),
                   jax.ShapeDtypeStruct((b, k, 1), jnp.float32)),
        grid=(2, b, nt),
        in_specs=[
            x_spec3,
            pl.BlockSpec((kh, c), lambda ci, bi, ti: (ci, 0)),
            pl.BlockSpec((kh, 1), lambda ci, bi, ti: (ci, 0)),
        ],
        out_specs=(stat_out_spec, stat_out_spec),
        compiler_params=pltpu.CompilerParams(
            dimension_semantics=("parallel", "parallel", "arbitrary"),
            vmem_limit_bytes=vmem_limit,
        ),
        cost_estimate=pl.CostEstimate(
            flops=2 * b * n_pad * k * c,
            transcendentals=b * n_pad * k + 2 * b * nt * k,
            bytes_accessed=b * c * n_pad * 4 + 2 * k * c + 2 * b * k * 4,
        ),
    )(x_p, a_bf, a0)

    x_spec2 = pl.BlockSpec((None, c, tn), lambda bi, ti: (bi, 0, ti))
    stat_in_spec = pl.BlockSpec((None, k, 1), lambda bi, ti: (bi, 0, 0))
    out_p = pl.pallas_call(
        _apply_kernel,
        out_shape=jax.ShapeDtypeStruct((b, c, n_pad), jnp.float32),
        grid=(b, nt),
        in_specs=[
            stat_in_spec,
            stat_in_spec,
            x_spec2,
            pl.BlockSpec((k, c), lambda bi, ti: (0, 0)),
            pl.BlockSpec((k, 1), lambda bi, ti: (0, 0)),
            pl.BlockSpec((c, k), lambda bi, ti: (0, 0)),
            pl.BlockSpec((c, 1), lambda bi, ti: (0, 0)),
        ],
        out_specs=x_spec2,
        compiler_params=pltpu.CompilerParams(
            dimension_semantics=("parallel", "parallel"),
            vmem_limit_bytes=vmem_limit,
        ),
        cost_estimate=pl.CostEstimate(
            flops=4 * b * n_pad * k * c,
            transcendentals=b * n_pad * k + b * n_pad + b * k,
            bytes_accessed=2 * b * c * n_pad * 4 + 4 * k * c + 2 * b * k * 4,
        ),
    )(m_stats, l_stats, x_p, a_bf, a0, w2_bf, shift)

    out = out_p if n_pad == n else out_p[:, :, :n]
    return out.reshape(b, c, h, w)


# ----------------------------------------------------------------------------
# Pure-JAX reference (mirrors External_attention.forward, inference-mode BN)
# ----------------------------------------------------------------------------
def _reference(x_nchw, params):
    b, c, h, w = x_nchw.shape
    n = h * w
    x = x_nchw.reshape(b, c, n)
    x1 = jnp.einsum("oc,bcn->bon", params["conv1_w"], x) + params["conv1_b"][None, :, None]
    logits = jnp.einsum("kc,bcn->bkn", params["linear0_w"], x1)
    attn = jax.nn.softmax(logits, axis=-1)
    attn = attn / (1e-9 + attn.sum(axis=1, keepdims=True))
    x2 = jnp.einsum("ck,bkn->bcn", params["linear1_w"], attn)
    eps = 1e-5
    s = params["bn_gamma"] / jnp.sqrt(params["bn_var"] + eps)
    t = params["bn_beta"] - params["bn_mean"] * s
    y = s[None, :, None] * jnp.einsum("oc,bcn->bon", params["conv2_w"], x2) + t[None, :, None]
    return jnp.maximum(y + x, 0.0).reshape(b, c, h, w)


# ----------------------------------------------------------------------------
# Synthetic parameters matching the module's __init__ shapes / init scheme
# ----------------------------------------------------------------------------
def init_params(c, key):
    k = K_ATTN
    k1, k2, k3, k4 = jax.random.split(key, 4)
    conv1_w = jax.random.normal(k1, (c, c), jnp.float32) * math.sqrt(2.0 / c)
    conv1_b = jax.random.normal(k2, (c,), jnp.float32) * 0.01
    linear0_w = jax.random.normal(k3, (k, c), jnp.float32) * math.sqrt(2.0 / k)
    linear1_w = linear0_w.T            # tied: permute(1, 0, 2) of linear_0
    conv2_w = jax.random.normal(k4, (c, c), jnp.float32) * math.sqrt(2.0 / c)
    # TODO(synk): training-mode SynchronizedBatchNorm2d (batch statistics) not modeled;
    # inference-mode affine BN is folded into the conv2 weights instead.
    return dict(
        conv1_w=conv1_w,
        conv1_b=conv1_b,
        linear0_w=linear0_w,
        linear1_w=linear1_w,
        conv2_w=conv2_w,
        bn_gamma=jnp.ones((c,), jnp.float32),
        bn_beta=jnp.zeros((c,), jnp.float32),
        bn_mean=jnp.zeros((c,), jnp.float32),
        bn_var=jnp.ones((c,), jnp.float32),
    )


if __name__ == "__main__":
    B, C, H, W = 2, 32, 16, 16
    key = jax.random.PRNGKey(0)
    kx, kp, kx2 = jax.random.split(key, 3)
    x = jax.random.normal(kx, (B, C, H, W), jnp.float32)
    params = init_params(C, kp)

    # fused single-pass path
    out = external_attention(x, params)
    jax.block_until_ready(out)
    ref = _reference(x, params)
    assert out.shape == (B, C, H, W)
    assert bool(jnp.isfinite(out).all())
    err = float(jnp.max(jnp.abs(out - ref)))
    assert err < 5e-2, f"fused path mismatch: max abs err {err}"

    # streaming two-pass path (K-split stats + ragged-N masking), forced small tiles
    x2 = jax.random.normal(kx2, (1, C, 13, 13), jnp.float32)   # N=169: no 128-multiple divisor
    out2 = external_attention(x2, params, force_two_pass=True, max_tile_n=128)
    jax.block_until_ready(out2)
    ref2 = _reference(x2, params)
    assert out2.shape == x2.shape
    assert bool(jnp.isfinite(out2).all())
    err2 = float(jnp.max(jnp.abs(out2 - ref2)))
    assert err2 < 5e-2, f"two-pass path mismatch: max abs err {err2}"

    print("KERNEL_OK")
</pallas_src>

<mosaic_0001>
module attributes {stable_mosaic.version = 11 : i64} {
  func.func @_fused_kernel(%arg0: i32, %arg1: memref<1x32x256xf32, #tpu.memory_space<vmem>>, %arg2: memref<64x32xbf16, #tpu.memory_space<vmem>>, %arg3: memref<64x1xf32, #tpu.memory_space<vmem>>, %arg4: memref<32x64xbf16, #tpu.memory_space<vmem>>, %arg5: memref<32x1xf32, #tpu.memory_space<vmem>>, %arg6: memref<1x32x256xf32, #tpu.memory_space<vmem>>) attributes {dimension_semantics = [#tpu.dimension_semantics<parallel>], iteration_bounds = array<i64: 2>, scalar_prefetch = 0 : i64, scratch_operands = 0 : i64, tpu.core_type = #tpu.core_type<tc>, window_params = [{transform_indices = @transform_0, window_bounds = array<i64: 1, 32, 256>}, {pipeline_mode = #tpu.pipeline_mode<synchronous>, transform_indices = @transform_1, window_bounds = array<i64: 64, 32>}, {pipeline_mode = #tpu.pipeline_mode<synchronous>, transform_indices = @transform_2, window_bounds = array<i64: 64, 1>}, {pipeline_mode = #tpu.pipeline_mode<synchronous>, transform_indices = @transform_3, window_bounds = array<i64: 32, 64>}, {pipeline_mode = #tpu.pipeline_mode<synchronous>, transform_indices = @transform_4, window_bounds = array<i64: 32, 1>}, {transform_indices = @transform_5, window_bounds = array<i64: 1, 32, 256>}]} {
    %c0 = arith.constant 0 : index
    %c0_0 = arith.constant 0 : index
    %c0_1 = arith.constant 0 : index
    %0 = vector.load %arg1[%c0, %c0_0, %c0_1] : memref<1x32x256xf32, #tpu.memory_space<vmem>>, vector<1x32x256xf32>
    %1 = vector.shape_cast %0 : vector<1x32x256xf32> to vector<32x256xf32>
    %2 = arith.truncf %1 : vector<32x256xf32> to vector<32x256xbf16>
    %c0_2 = arith.constant 0 : index
    %c0_3 = arith.constant 0 : index
    %3 = vector.load %arg2[%c0_2, %c0_3] : memref<64x32xbf16, #tpu.memory_space<vmem>>, vector<64x32xbf16>
    %cst = arith.constant dense<0.000000e+00> : vector<64x256xf32>
    %4 = tpu.matmul %3, %2, %cst {dimension_numbers = #tpu.dot_dimension_numbers<[1], [0], [0], [1], [0, 0, 1, 1], [], []>} : vector<64x32xbf16>, vector<32x256xbf16>, vector<64x256xf32> -> vector<64x256xf32>
    %c0_4 = arith.constant 0 : index
    %c0_5 = arith.constant 0 : index
    %5 = vector.load %arg3[%c0_4, %c0_5] : memref<64x1xf32, #tpu.memory_space<vmem>>, vector<64x1xf32>
    %6 = vector.broadcast %5 : vector<64x1xf32> to vector<64x256xf32>
    %7 = arith.addf %4, %6 : vector<64x256xf32>
    %cst_6 = arith.constant dense<0xFF800000> : vector<64xf32>
    %8 = vector.multi_reduction <maximumf>, %7, %cst_6 [1] : vector<64x256xf32> to vector<64xf32>
    %9 = vector.shape_cast %8 : vector<64xf32> to vector<64x1xf32>
    %10 = vector.broadcast %9 : vector<64x1xf32> to vector<64x256xf32>
    %11 = arith.subf %7, %10 : vector<64x256xf32>
    %12 = math.exp %11 : vector<64x256xf32>
    %cst_7 = arith.constant dense<0.000000e+00> : vector<64xf32>
    %13 = vector.multi_reduction <add>, %12, %cst_7 [1] : vector<64x256xf32> to vector<64xf32>
    %14 = vector.shape_cast %13 : vector<64xf32> to vector<64x1xf32>
    %15 = tpu.reciprocal %14 {approx = true} : vector<64x1xf32> -> vector<64x1xf32>
    %16 = vector.broadcast %15 : vector<64x1xf32> to vector<64x256xf32>
    %17 = arith.mulf %12, %16 : vector<64x256xf32>
    %cst_8 = arith.constant dense<0.000000e+00> : vector<256xf32>
    %18 = vector.multi_reduction <add>, %17, %cst_8 [0] : vector<64x256xf32> to vector<256xf32>
    %19 = vector.shape_cast %18 : vector<256xf32> to vector<1x256xf32>
    %cst_9 = arith.constant 9.99999971E-10 : f32
    %20 = vector.broadcast %cst_9 : f32 to vector<1x256xf32>
    %21 = arith.addf %19, %20 : vector<1x256xf32>
    %22 = tpu.reciprocal %21 {approx = true} : vector<1x256xf32> -> vector<1x256xf32>
    %23 = vector.broadcast %22 : vector<1x256xf32> to vector<64x256xf32>
    %24 = arith.mulf %17, %23 : vector<64x256xf32>
    %c0_10 = arith.constant 0 : index
    %c0_11 = arith.constant 0 : index
    %25 = vector.load %arg4[%c0_10, %c0_11] : memref<32x64xbf16, #tpu.memory_space<vmem>>, vector<32x64xbf16>
    %26 = arith.truncf %24 : vector<64x256xf32> to vector<64x256xbf16>
    %cst_12 = arith.constant dense<0.000000e+00> : vector<32x256xf32>
    %27 = tpu.matmul %25, %26, %cst_12 {dimension_numbers = #tpu.dot_dimension_numbers<[1], [0], [0], [1], [0, 0, 1, 1], [], []>} : vector<32x64xbf16>, vector<64x256xbf16>, vector<32x256xf32> -> vector<32x256xf32>
    %c0_13 = arith.constant 0 : index
    %c0_14 = arith.constant 0 : index
    %28 = vector.load %arg5[%c0_13, %c0_14] : memref<32x1xf32, #tpu.memory_space<vmem>>, vector<32x1xf32>
    %29 = vector.broadcast %28 : vector<32x1xf32> to vector<32x256xf32>
    %30 = arith.addf %27, %29 : vector<32x256xf32>
    %31 = arith.addf %30, %1 : vector<32x256xf32>
    %cst_15 = arith.constant 0.000000e+00 : f32
    %32 = vector.broadcast %cst_15 : f32 to vector<32x256xf32>
    %33 = arith.maximumf %31, %32 : vector<32x256xf32>
    %c0_16 = arith.constant 0 : index
    %c0_17 = arith.constant 0 : index
    %c0_18 = arith.constant 0 : index
    %34 = vector.load %arg6[%c0_16, %c0_17, %c0_18] : memref<1x32x256xf32, #tpu.memory_space<vmem>>, vector<1x32x256xf32>
    %35 = vector.shape_cast %34 : vector<1x32x256xf32> to vector<32x256xf32>
    %36 = vector.shape_cast %33 : vector<32x256xf32> to vector<1x32x256xf32>
    tpu.vector_store %arg6[%c0_16, %c0_17, %c0_18], %36 {strides = array<i32>} : memref<1x32x256xf32, #tpu.memory_space<vmem>>, vector<1x32x256xf32>,
    return
  }
  func.func @transform_0(%arg0: i32) -> (i32, i32, i32) {
    %c0_i32 = arith.constant 0 : i32
    %c0_i32_0 = arith.constant 0 : i32
    %c0_i32_1 = arith.constant 0 : i32
    return %arg0, %c0_i32, %c0_i32_0 : i32, i32, i32
  }
  func.func @transform_1(%arg0: i32) -> (i32, i32) {
    %c0_i32 = arith.constant 0 : i32
    %c0_i32_0 = arith.constant 0 : i32
    %c0_i32_1 = arith.constant 0 : i32
    return %c0_i32, %c0_i32_0 : i32, i32
  }
  func.func @transform_2(%arg0: i32) -> (i32, i32) {
    %c0_i32 = arith.constant 0 : i32
    %c0_i32_0 = arith.constant 0 : i32
    %c0_i32_1 = arith.constant 0 : i32
    return %c0_i32, %c0_i32_0 : i32, i32
  }
  func.func @transform_3(%arg0: i32) -> (i32, i32) {
    %c0_i32 = arith.constant 0 : i32
    %c0_i32_0 = arith.constant 0 : i32
    %c0_i32_1 = arith.constant 0 : i32
    return %c0_i32, %c0_i32_0 : i32, i32
  }
  func.func @transform_4(%arg0: i32) -> (i32, i32) {
    %c0_i32 = arith.constant 0 : i32
    %c0_i32_0 = arith.constant 0 : i32
    %c0_i32_1 = arith.constant 0 : i32
    return %c0_i32, %c0_i32_0 : i32, i32
  }
  func.func @transform_5(%arg0: i32) -> (i32, i32, i32) {
    %c0_i32 = arith.constant 0 : i32
    %c0_i32_0 = arith.constant 0 : i32
    %c0_i32_1 = arith.constant 0 : i32
    return %arg0, %c0_i32, %c0_i32_0 : i32, i32, i32
  }
}

</mosaic_0001>

<llo_original>
// kernel: tpu_custom_call.1
$region0: #{tpu_custom_call.1}
  #allocation0 [shape = 'u32[]', space=smem, size = 0x4, offset = 0x4, fixed_abs, tag = 'smem constant byte address 0x4 - core index']
  #allocation1 [shape = 'u32[72,128]{1,0:T(1,128)}', space=vmem, size = 0x9000, scoped, tag = 'internal scratch']
  %s0 = inlined_call_operand.vmem [shape: f32[2,32,256], index: 0, kind: input, shape index: {}]
  %s1 = inlined_call_operand.vmem [shape: bf16[64,32], index: 1, kind: input, shape index: {}]
  %s2 = inlined_call_operand.vmem [shape: f32[64,1], index: 2, kind: input, shape index: {}]
  %s3 = inlined_call_operand.vmem [shape: bf16[32,64], index: 3, kind: input, shape index: {}]
  %s4 = inlined_call_operand.vmem [shape: f32[32,1], index: 4, kind: input, shape index: {}]
  %s5 = inlined_call_operand.hbm [shape: f32[2,32,256], index: 5, kind: output, shape index: {}]
  %s6 = sld [smem:[#allocation0]]
  $region53: #{tpu_custom_call.1} parent=0
    _
  %s8 = ssub.s32 1, %s6
  %s9 = scalar_select 0, %s8, %s6
  $region1: #{tpu_custom_call.1} parent=0
    #allocation2 [shape = 'u8[65536]{0}', space=vmem, size = 0x10000, scoped, tag = 'output window, operand 0']
    #allocation3 [shape = 's32[2]{0}', space=sflag, size = 0x8, scoped, tag = 'scoped memory for tpu_custom_call.1']
    %10 = vsyncpa [#allocation3], 0
    %s11 = scalar_lea.sflag [#allocation3], 1
    %12 = vsyncpa %s11, 0
    loop: start=0, step=1, limit=4
    $region2: #{tpu_custom_call.1} parent=1 // loop_pre_header
      _
    $region3: #{tpu_custom_call.1} parent=1 // loop_header
      %s14 = sphi 0, %s18
      %p15 = scmp.ge.s32.totalorder %s14, 4
      %s24 = sphi 0, %s26
      %s27 = sphi 0, %s24
      %s28 = sphi 0, %s27
      %s44 = sphi 0, %s28
      %s48 = sphi 0, %s48
      %s50 = sphi 0, %s48
      %s51 = sphi 0, %s50
      %s65 = sphi 0, %s51
      %s69 = sphi 0, %s69
      %s71 = sphi 0, %s69
      %s72 = sphi 0, %s71
      %s86 = sphi 0, %s72
      %s90 = sphi 0, %s90
      %s92 = sphi 0, %s90
      %s93 = sphi 0, %s92
      %s107 = sphi 0, %s93
      %s111 = sphi 0, %s111
      %s113 = sphi 0, %s111
      %s114 = sphi 0, %s113
      %s128 = sphi 0, %s114
      %s134 = sphi 0, %s136
      %s137 = sphi 0, %s134
      %s138 = sphi 0, %s137
      %s154 = sphi 0, %s138
    $region4: #{tpu_custom_call.1} parent=1 // loop_header_branch
      %17 = sbr.rel (%p15) target = $region8
    $region5: #{tpu_custom_call.1} parent=1 // loop_body
      %s19 = ssub.s32 %s14, 1
      %s20 = ssub.s32 %s14, 2
      %s21 = sadd.s32 %s14, 1
      %s22 = ssub.s32 %s14, %s21
      %p23 = scmp.eq.s32.totalorder %s22, 0
      %s25 = sadd.s32 %s24, 1
      %s26 = scalar_select %p23, %s24, %s25
      %p29 = pneg %p23
      %p30 = scmp.eq.s32.totalorder %s14, 1
      %p31 = por %p29, %p30
      %p32 = scmp.ne.s32.totalorder %s24, %s27
      %p33 = scmp.eq.s32.totalorder %s14, 0
      %p34 = por %p32, %p33
      %p35 = scmp.ne.s32.totalorder %s24, %s27
      %p36 = scmp.eq.s32.totalorder %s19, 1
      %p37 = por %p35, %p36
      %p38 = scmp.ne.s32.totalorder %s27, %s28
      %p39 = scmp.eq.s32.totalorder %s19, 0
      %p40 = por %p38, %p39
      %p41 = scmp.ne.s32.totalorder %s27, %s28
      %p42 = scmp.eq.s32.totalorder %s20, 1
      %p43 = por %p41, %p42
      %p45 = scmp.ne.s32.totalorder %s28, %s44
      %p46 = scmp.eq.s32.totalorder %s20, 0
      %p47 = por %p45, %p46
      %s49 = sadd.s32 %s48, 1
      %p52 = scmp.eq.s32.totalorder %s14, 1
      %p53 = scmp.ne.s32.totalorder %s48, %s50
      %p54 = scmp.eq.s32.totalorder %s14, 0
      %p55 = por %p53, %p54
      %p56 = scmp.ne.s32.totalorder %s48, %s50
      %p57 = scmp.eq.s32.totalorder %s19, 1
      %p58 = por %p56, %p57
      %p59 = scmp.ne.s32.totalorder %s50, %s51
      %p60 = scmp.eq.s32.totalorder %s19, 0
      %p61 = por %p59, %p60
      %p62 = scmp.ne.s32.totalorder %s50, %s51
      %p63 = scmp.eq.s32.totalorder %s20, 1
      %p64 = por %p62, %p63
      %p66 = scmp.ne.s32.totalorder %s51, %s65
      %p67 = scmp.eq.s32.totalorder %s20, 0
      %p68 = por %p66, %p67
      %s70 = sadd.s32 %s69, 1
      %p73 = scmp.eq.s32.totalorder %s14, 1
      %p74 = scmp.ne.s32.totalorder %s69, %s71
      %p75 = scmp.eq.s32.totalorder %s14, 0
      %p76 = por %p74, %p75
      %p77 = scmp.ne.s32.totalorder %s69, %s71
      %p78 = scmp.eq.s32.totalorder %s19, 1
      %p79 = por %p77, %p78
      %p80 = scmp.ne.s32.totalorder %s71, %s72
      %p81 = scmp.eq.s32.totalorder %s19, 0
      %p82 = por %p80, %p81
      %p83 = scmp.ne.s32.totalorder %s71, %s72
      %p84 = scmp.eq.s32.totalorder %s20, 1
      %p85 = por %p83, %p84
      %p87 = scmp.ne.s32.totalorder %s72, %s86
      %p88 = scmp.eq.s32.totalorder %s20, 0
      %p89 = por %p87, %p88
      %s91 = sadd.s32 %s90, 1
      %p94 = scmp.eq.s32.totalorder %s14, 1
      %p95 = scmp.ne.s32.totalorder %s90, %s92
      %p96 = scmp.eq.s32.totalorder %s14, 0
      %p97 = por %p95, %p96
      %p98 = scmp.ne.s32.totalorder %s90, %s92
      %p99 = scmp.eq.s32.totalorder %s19, 1
      %p100 = por %p98, %p99
      %p101 = scmp.ne.s32.totalorder %s92, %s93
      %p102 = scmp.eq.s32.totalorder %s19, 0
      %p103 = por %p101, %p102
      %p104 = scmp.ne.s32.totalorder %s92, %s93
      %p105 = scmp.eq.s32.totalorder %s20, 1
      %p106 = por %p104, %p105
      %p108 = scmp.ne.s32.totalorder %s93, %s107
      %p109 = scmp.eq.s32.totalorder %s20, 0
      %p110 = por %p108, %p109
      %s112 = sadd.s32 %s111, 1
      %p115 = scmp.eq.s32.totalorder %s14, 1
      %p116 = scmp.ne.s32.totalorder %s111, %s113
      %p117 = scmp.eq.s32.totalorder %s14, 0
      %p118 = por %p116, %p117
      %p119 = scmp.ne.s32.totalorder %s111, %s113
      %p120 = scmp.eq.s32.totalorder %s19, 1
      %p121 = por %p119, %p120
      %p122 = scmp.ne.s32.totalorder %s113, %s114
      %p123 = scmp.eq.s32.totalorder %s19, 0
      %p124 = por %p122, %p123
      %p125 = scmp.ne.s32.totalorder %s113, %s114
      %p126 = scmp.eq.s32.totalorder %s20, 1
      %p127 = por %p125, %p126
      %p129 = scmp.ne.s32.totalorder %s114, %s128
      %p130 = scmp.eq.s32.totalorder %s20, 0
      %p131 = por %p129, %p130
      %s132 = ssub.s32 %s14, %s21
      %p133 = scmp.eq.s32.totalorder %s132, 0
      %s135 = sadd.s32 %s134, 1
      %s136 = scalar_select %p133, %s134, %s135
      %p139 = pneg %p133
      %p140 = scmp.eq.s32.totalorder %s14, 1
      %p141 = por %p139, %p140
      %p142 = scmp.ne.s32.totalorder %s134, %s137
      %p143 = scmp.eq.s32.totalorder %s14, 0
      %p144 = por %p142, %p143
      %p145 = scmp.ne.s32.totalorder %s134, %s137
      %p146 = scmp.eq.s32.totalorder %s19, 1
      %p147 = por %p145, %p146
      %p148 = scmp.ne.s32.totalorder %s137, %s138
      %p149 = scmp.eq.s32.totalorder %s19, 0
      %p150 = por %p148, %p149
      %p151 = scmp.ne.s32.totalorder %s137, %s138
      %p152 = scmp.eq.s32.totalorder %s20, 1
      %p153 = por %p151, %p152
      %p155 = scmp.ne.s32.totalorder %s138, %s154
      %p156 = scmp.eq.s32.totalorder %s20, 0
      %p157 = por %p155, %p156
      %p158 = scmp.le.s32.totalorder 1, %s14
      %p159 = scmp.lt.s32.totalorder %s14, 3
      %p160 = pnand %p158, %p159
      %p161 = pneg %p160
      // Predicated region
      $region9: #{tpu_custom_call.1} parent=5 // pred_check
        _
      $region10: #{tpu_custom_call.1} parent=5 // pred_check_branch
        %163 = sbr.rel (%p160) target = $region12
      $region11: #{tpu_custom_call.1} parent=5 // pred_region
        %s164 = ssub.s32 %s14, 1
        // Predicated region
        $region13: #{tpu_custom_call.1} parent=11 // pred_check
          %p165 = pneg %p61
        $region14: #{tpu_custom_call.1} parent=11 // pred_check_branch
          %167 = sbr.rel (%p165) target = $region16
        $region15: #{tpu_custom_call.1} parent=11 // pred_region
          _
        $region16: #{tpu_custom_call.1} parent=11 // pred_fallthru
          _
        // Predicated region
        $region17: #{tpu_custom_call.1} parent=11 // pred_check
          %p168 = pneg %p82
        $region18: #{tpu_custom_call.1} parent=11 // pred_check_branch
          %170 = sbr.rel (%p168) target = $region20
        $region19: #{tpu_custom_call.1} parent=11 // pred_region
          _
        $region20: #{tpu_custom_call.1} parent=11 // pred_fallthru
          _
        // Predicated region
        $region21: #{tpu_custom_call.1} parent=11 // pred_check
          %p171 = pneg %p103
        $region22: #{tpu_custom_call.1} parent=11 // pred_check_branch
          %173 = sbr.rel (%p171) target = $region24
        $region23: #{tpu_custom_call.1} parent=11 // pred_region
          _
        $region24: #{tpu_custom_call.1} parent=11 // pred_fallthru
          _
        // Predicated region
        $region25: #{tpu_custom_call.1} parent=11 // pred_check
          %p174 = pneg %p124
        $region26: #{tpu_custom_call.1} parent=11 // pred_check_branch
          %176 = sbr.rel (%p174) target = $region28
        $region27: #{tpu_custom_call.1} parent=11 // pred_region
          _
        $region28: #{tpu_custom_call.1} parent=11 // pred_fallthru
          _
      $region12: #{tpu_custom_call.1} parent=5 // pred_fallthru
        _
      %p177 = scmp.lt.s32.totalorder %s14, 2
      // Predicated region
      $region29: #{tpu_custom_call.1} parent=5 // pred_check
        %p178 = pneg %p177
      $region30: #{tpu_custom_call.1} parent=5 // pred_check_branch
        %180 = sbr.rel (%p178) target = $region32
      $region31: #{tpu_custom_call.1} parent=5 // pred_region
        // Predicated region
        $region33: #{tpu_custom_call.1} parent=31 // pred_check
          %p181 = pneg %p34
        $region34: #{tpu_custom_call.1} parent=31 // pred_check_branch
          %183 = sbr.rel (%p181) target = $region36
        $region35: #{tpu_custom_call.1} parent=31 // pred_region
          %p184 = scmp.lt.s32.totalorder %s14, 1
          %s185 = scalar_select %p184, %s14, 1
          %s186 = smul.addr %s185, 8
          %s187 = smul.addr %s186, 8
          %s188 = scalar_lea.vmem %s0, %s187
        $region36: #{tpu_custom_call.1} parent=31 // pred_fallthru
          _
      $region32: #{tpu_custom_call.1} parent=5 // pred_fallthru
        _
      %p189 = scmp.le.s32.totalorder 1, %s14
      %p190 = scmp.lt.s32.totalorder %s14, 3
      %p191 = pnand %p189, %p190
      %p192 = pneg %p191
      // Predicated region
      $region37: #{tpu_custom_call.1} parent=5 // pred_check
        _
      $region38: #{tpu_custom_call.1} parent=5 // pred_check_branch
        %194 = sbr.rel (%p191) target = $region40
      $region39: #{tpu_custom_call.1} parent=5 // pred_region
        %s195 = ssub.s32 %s14, 1
        %p196 = scmp.lt.s32.totalorder %s19, 1
        %s197 = scalar_select %p196, %s19, 1
        %s198 = smul.addr %s197, 8
        %s199 = smul.addr %s198, 8
        %s200 = scalar_lea.vmem %s0, %s199
        %p201 = pneg %p40
        %p202 = pneg %p37
        %p203 = pneg %p61
        %p204 = pneg %p58
        %p205 = pneg %p82
        %p206 = pneg %p79
        %p207 = pneg %p103
        %p208 = pneg %p100
        %p209 = pneg %p124
        %p210 = pneg %p121
        %p211 = pneg %p150
        %p212 = pneg %p147
        %s213 = sand.u32 %s137, 1
        %s214 = scalar_lea.sflag [#allocation3], %s213
        %s215 = sand.u32 %s137, 1
        %s216 = smul.addr %s215, 64
        %s217 = scalar_lea.vmem [#allocation2], %s216
        %p218 = scmp.lt.s32.totalorder %s19, 1
        %s219 = scalar_select %p218, %s19, 1
        %s220 = smul.addr %s219, 8
        %s221 = smul.addr %s220, 8
        %s222 = scalar_lea.vmem %s0, %s221
        %v224 = vld [vmem:[%s222] sm:$0xff]
        %v225 = vld [vmem:[%s222 + $0x8] sm:$0xff]
        %v226 = vld [vmem:[%s222 + $0x10] sm:$0xff]
        %v227 = vld [vmem:[%s222 + $0x18] sm:$0xff]
        %v228 = vld [vmem:[%s222 + $0x20] sm:$0xff]
        %v229 = vld [vmem:[%s222 + $0x28] sm:$0xff]
        %v230 = vld [vmem:[%s222 + $0x30] sm:$0xff]
        %v231 = vld [vmem:[%s222 + $0x38] sm:$0xff]
        %v232 = vpack.c.bf16 %v226, %v224
        %v233 = vpack.c.bf16 %v227, %v225
        %v234 = vpack.c.bf16 %v230, %v228
        %v235 = vpack.c.bf16 %v231, %v229
        %v236 = vld [vmem:[%s1] sm:$0xf]
        %v237 = vld [vmem:[%s1 + $0x4] sm:$0xf]
        %v238 = vld [vmem:[%s1 + $0x8] sm:$0xf]
        %v239 = vld [vmem:[%s1 + $0xc] sm:$0xf]
        %v240 = vld [vmem:[%s1 + $0x10] sm:$0xf]
        %v241 = vld [vmem:[%s1 + $0x14] sm:$0xf]
        %v242 = vld [vmem:[%s1 + $0x18] sm:$0xf]
        %v243 = vld [vmem:[%s1 + $0x1c] sm:$0xf]
        %v244 = vld [vmem:[%s2] sm:$0xff]
        %v245 = vld [vmem:[%s2 + $0x8] sm:$0xff]
        %v246 = vld [vmem:[%s2 + $0x10] sm:$0xff]
        %v247 = vld [vmem:[%s2 + $0x18] sm:$0xff]
        %v248 = vld [vmem:[%s2 + $0x20] sm:$0xff]
        %v249 = vld [vmem:[%s2 + $0x28] sm:$0xff]
        %v250 = vld [vmem:[%s2 + $0x30] sm:$0xff]
        %v251 = vld [vmem:[%s2 + $0x38] sm:$0xff]
        %253 = vset.pattern.permute.xlu0 0
        %254 = vperm.xlu0 %253, %v244
        %v255 = vpop.permute.xlu0 %254
        %258 = vset.pattern.permute.xlu0 0
        %259 = vperm.xlu0 %258, %v245
        %v260 = vpop.permute.xlu0 %259
        %263 = vset.pattern.permute.xlu0 0
        %264 = vperm.xlu0 %263, %v246
        %v265 = vpop.permute.xlu0 %264
        %268 = vset.pattern.permute.xlu0 0
        %269 = vperm.xlu0 %268, %v247
        %v270 = vpop.permute.xlu0 %269
        %273 = vset.pattern.permute.xlu0 0
        %274 = vperm.xlu0 %273, %v248
        %v275 = vpop.permute.xlu0 %274
        %278 = vset.pattern.permute.xlu0 0
        %279 = vperm.xlu0 %278, %v249
        %v280 = vpop.permute.xlu0 %279
        %283 = vset.pattern.permute.xlu0 0
        %284 = vperm.xlu0 %283, %v250
        %v285 = vpop.permute.xlu0 %284
        %288 = vset.pattern.permute.xlu0 0
        %289 = vperm.xlu0 %288, %v251
        %v290 = vpop.permute.xlu0 %289
        %v300 = vunpack.c.l.b16 %v236
        %v301 = vunpack.c.l.b16 %v237
        %v302 = vunpack.c.l.b16 %v238
        %v303 = vunpack.c.l.b16 %v239
        %v304 = vunpack.c.l.b16 %v240
        %v305 = vunpack.c.l.b16 %v241
        %v306 = vunpack.c.l.b16 %v242
        %v307 = vunpack.c.l.b16 %v243
        %v308 = vpack.c.b16 %v301, %v300
        %v309 = vpack.c.b16 %v303, %v302
        %v310 = vpack.c.b16 %v305, %v304
        %v311 = vpack.c.b16 %v307, %v306
        %vm312 = vcmask 261120
        %v314 = vsel %vm312, %v308, 0
        %v317 = vsel %vm312, %v309, 0
        %v320 = vsel %vm312, %v310, 0
        %v323 = vsel %vm312, %v311, 0
        %325 = vmatpush.bf16.msra.mxu0 0
        %326 = vmatpush.bf16.msra.mxu0 0
        %327 = vmatpush.bf16.msra.mxu0 0
        %328 = vmatpush.bf16.msra.mxu0 0
        %329 = vmatpush.bf16.msra.mxu0 0
        %330 = vmatpush.bf16.msra.mxu0 0
        %331 = vmatpush.bf16.msra.mxu0 %v234
        %332 = vmatpush.bf16.msra.mxu0 %v232
        %333 = vmatmul.bf16.gmra.mxu0 %v314
        %v334 = vpop.f32.mrf.mxu0
        %v335 = vadd.f32 %v255, %v334
        %v336 = vpop.f32.mrf.mxu0
        %v337 = vadd.f32 %v260, %v336
        %338 = vmatmul.bf16.gmra.mxu0 %v317
        %v339 = vpop.f32.mrf.mxu0
        %v340 = vadd.f32 %v265, %v339
        %v341 = vpop.f32.mrf.mxu0
        %v342 = vadd.f32 %v270, %v341
        %343 = vmatmul.bf16.gmra.mxu0 %v320
        %v344 = vpop.f32.mrf.mxu0
        %v345 = vadd.f32 %v275, %v344
        %v346 = vpop.f32.mrf.mxu0
        %v347 = vadd.f32 %v280, %v346
        %348 = vmatmul.bf16.gmra.mxu0 %v323
        %v349 = vpop.f32.mrf.mxu0
        %v350 = vadd.f32 %v285, %v349
        %v351 = vpop.f32.mrf.mxu0
        %v352 = vadd.f32 %v290, %v351
        %353 = vdwg.mxu0
        %354 = vmatpush.bf16.msra.mxu0 0
        %355 = vmatpush.bf16.msra.mxu0 0
        %356 = vmatpush.bf16.msra.mxu0 0
        %357 = vmatpush.bf16.msra.mxu0 0
        %358 = vmatpush.bf16.msra.mxu0 0
        %359 = vmatpush.bf16.msra.mxu0 0
        %360 = vmatpush.bf16.msra.mxu0 %v235
        %361 = vmatpush.bf16.msra.mxu0 %v233
        %362 = vmatmul.bf16.gmra.mxu0 %v314
        %v363 = vpop.f32.mrf.mxu0
        %v364 = vadd.f32 %v255, %v363
        %v365 = vpop.f32.mrf.mxu0
        %v366 = vadd.f32 %v260, %v365
        %367 = vmatmul.bf16.gmra.mxu0 %v317
        %v368 = vpop.f32.mrf.mxu0
        %v369 = vadd.f32 %v265, %v368
        %v370 = vpop.f32.mrf.mxu0
        %v371 = vadd.f32 %v270, %v370
        %372 = vmatmul.bf16.gmra.mxu0 %v320
        %v373 = vpop.f32.mrf.mxu0
        %v374 = vadd.f32 %v275, %v373
        %v375 = vpop.f32.mrf.mxu0
        %v376 = vadd.f32 %v280, %v375
        %377 = vmatmul.bf16.gmra.mxu0 %v323
        %v378 = vpop.f32.mrf.mxu0
        %v379 = vadd.f32 %v285, %v378
        %v380 = vpop.f32.mrf.mxu0
        %v381 = vadd.f32 %v290, %v380
        %382 = vdwg.mxu0
        %v383 = vmax.f32 %v335, %v364
        %384 = vmax.xlane.f32.xlu0 %v383
        %v385 = vpop.xlane.xlu0 %384
        %v386 = vmax.f32 %v337, %v366
        %387 = vmax.xlane.f32.xlu0 %v386
        %v388 = vpop.xlane.xlu0 %387
        %v389 = vmax.f32 %v340, %v369
        %390 = vmax.xlane.f32.xlu0 %v389
        %v391 = vpop.xlane.xlu0 %390
        %v392 = vmax.f32 %v342, %v371
        %393 = vmax.xlane.f32.xlu0 %v392
        %v394 = vpop.xlane.xlu0 %393
        %v395 = vmax.f32 %v345, %v374
        %396 = vmax.xlane.f32.xlu0 %v395
        %v397 = vpop.xlane.xlu0 %396
        %v398 = vmax.f32 %v347, %v376
        %399 = vmax.xlane.f32.xlu0 %v398
        %v400 = vpop.xlane.xlu0 %399
        %v401 = vmax.f32 %v350, %v379
        %402 = vmax.xlane.f32.xlu0 %v401
        %v403 = vpop.xlane.xlu0 %402
        %v404 = vmax.f32 %v352, %v381
        %405 = vmax.xlane.f32.xlu0 %v404
        %v406 = vpop.xlane.xlu0 %405
        %v407 = vsub.f32 %v335, %v385
        %v408 = vsub.f32 %v364, %v385
        %v409 = vsub.f32 %v337, %v388
        %v410 = vsub.f32 %v366, %v388
        %v411 = vsub.f32 %v340, %v391
        %v412 = vsub.f32 %v369, %v391
        %v413 = vsub.f32 %v342, %v394
        %v414 = vsub.f32 %v371, %v394
        %v415 = vsub.f32 %v345, %v397
        %v416 = vsub.f32 %v374, %v397
        %v417 = vsub.f32 %v347, %v400
        %v418 = vsub.f32 %v376, %v400
        %v419 = vsub.f32 %v350, %v403
        %v420 = vsub.f32 %v379, %v403
        %v421 = vsub.f32 %v352, %v406
        %v422 = vsub.f32 %v381, %v406
        %v423 = vmul.f32 %v407, 1.442695
        %v424 = vpow.pop %v423
        %v425 = vmul.f32 %v408, 1.442695
        %v426 = vpow.pop %v425
        %v427 = vmul.f32 %v409, 1.442695
        %v428 = vpow.pop %v427
        %v429 = vmul.f32 %v410, 1.442695
        %v430 = vpow.pop %v429
        %v431 = vmul.f32 %v411, 1.442695
        %v432 = vpow.pop %v431
        %v433 = vmul.f32 %v412, 1.442695
        %v434 = vpow.pop %v433
        %v435 = vmul.f32 %v413, 1.442695
        %v436 = vpow.pop %v435
        %v437 = vmul.f32 %v414, 1.442695
        %v438 = vpow.pop %v437
        %v439 = vmul.f32 %v415, 1.442695
        %v440 = vpow.pop %v439
        %v441 = vmul.f32 %v416, 1.442695
        %v442 = vpow.pop %v441
        %v443 = vmul.f32 %v417, 1.442695
        %v444 = vpow.pop %v443
        %v445 = vmul.f32 %v418, 1.442695
        %v446 = vpow.pop %v445
        %v447 = vmul.f32 %v419, 1.442695
        %v448 = vpow.pop %v447
        %v449 = vmul.f32 %v420, 1.442695
        %v450 = vpow.pop %v449
        %v451 = vmul.f32 %v421, 1.442695
        %v452 = vpow.pop %v451
        %v453 = vmul.f32 %v422, 1.442695
        %v454 = vpow.pop %v453
        %v455 = vadd.f32 %v424, %v426
        %456 = vadd.xlane.f32.xlu0 %v455
        %v457 = vpop.xlane.xlu0 %456
        %v458 = vadd.f32 %v428, %v430
        %459 = vadd.xlane.f32.xlu0 %v458
        %v460 = vpop.xlane.xlu0 %459
        %v461 = vadd.f32 %v432, %v434
        %462 = vadd.xlane.f32.xlu0 %v461
        %v463 = vpop.xlane.xlu0 %462
        %v464 = vadd.f32 %v436, %v438
        %465 = vadd.xlane.f32.xlu0 %v464
        %v466 = vpop.xlane.xlu0 %465
        %v467 = vadd.f32 %v440, %v442
        %468 = vadd.xlane.f32.xlu0 %v467
        %v469 = vpop.xlane.xlu0 %468
        %v470 = vadd.f32 %v444, %v446
        %471 = vadd.xlane.f32.xlu0 %v470
        %v472 = vpop.xlane.xlu0 %471
        %v473 = vadd.f32 %v448, %v450
        %474 = vadd.xlane.f32.xlu0 %v473
        %v475 = vpop.xlane.xlu0 %474
        %v476 = vadd.f32 %v452, %v454
        %477 = vadd.xlane.f32.xlu0 %v476
        %v478 = vpop.xlane.xlu0 %477
        %v479 = vrcp.pop %v457
        %v480 = vrcp.pop %v460
        %v481 = vrcp.pop %v463
        %v482 = vrcp.pop %v466
        %v483 = vrcp.pop %v469
        %v484 = vrcp.pop %v472
        %v485 = vrcp.pop %v475
        %v486 = vrcp.pop %v478
        %v487 = vmul.f32 %v424, %v479
        %v488 = vmul.f32 %v426, %v479
        %v489 = vmul.f32 %v428, %v480
        %v490 = vmul.f32 %v430, %v480
        %v491 = vmul.f32 %v432, %v481
        %v492 = vmul.f32 %v434, %v481
        %v493 = vmul.f32 %v436, %v482
        %v494 = vmul.f32 %v438, %v482
        %v495 = vmul.f32 %v440, %v483
        %v496 = vmul.f32 %v442, %v483
        %v497 = vmul.f32 %v444, %v484
        %v498 = vmul.f32 %v446, %v484
        %v499 = vmul.f32 %v448, %v485
        %v500 = vmul.f32 %v450, %v485
        %v501 = vmul.f32 %v452, %v486
        %v502 = vmul.f32 %v454, %v486
        %v503 = vadd.f32 %v487, %v489
        %v504 = vadd.f32 %v503, %v491
        %v505 = vadd.f32 %v504, %v493
        %v506 = vadd.f32 %v505, %v495
        %v507 = vadd.f32 %v506, %v497
        %v508 = vadd.f32 %v507, %v499
        %v509 = vadd.f32 %v508, %v501
        %v510 = vrot.slane %v509, 4
        %v511 = vadd.f32 %v509, %v510
        %v512 = vrot.slane %v511, 2
        %v513 = vadd.f32 %v511, %v512
        %v514 = vrot.slane %v513, 1
        %v515 = vadd.f32 %v513, %v514
        %v516 = vadd.f32 %v488, %v490
        %v517 = vadd.f32 %v516, %v492
        %v518 = vadd.f32 %v517, %v494
        %v519 = vadd.f32 %v518, %v496
        %v520 = vadd.f32 %v519, %v498
        %v521 = vadd.f32 %v520, %v500
        %v522 = vadd.f32 %v521, %v502
        %v523 = vrot.slane %v522, 4
        %v524 = vadd.f32 %v522, %v523
        %v525 = vrot.slane %v524, 2
        %v526 = vadd.f32 %v524, %v525
        %v527 = vrot.slane %v526, 1
        %v528 = vadd.f32 %v526, %v527
        %v529 = vadd.f32 %v515, 1e-09
        %v530 = vadd.f32 %v528, 1e-09
        %v531 = vrcp.pop %v529
        %v532 = vrcp.pop %v530
        %v533 = vmul.f32 %v487, %v531
        %v534 = vmul.f32 %v488, %v532
        %v535 = vmul.f32 %v489, %v531
        %v536 = vmul.f32 %v490, %v532
        %v537 = vmul.f32 %v491, %v531
        %v538 = vmul.f32 %v492, %v532
        %v539 = vmul.f32 %v493, %v531
        %v540 = vmul.f32 %v494, %v532
        %v541 = vmul.f32 %v495, %v531
        %v542 = vmul.f32 %v496, %v532
        %v543 = vmul.f32 %v497, %v531
        %v544 = vmul.f32 %v498, %v532
        %v545 = vmul.f32 %v499, %v531
        %v546 = vmul.f32 %v500, %v532
        %v547 = vmul.f32 %v501, %v531
        %v548 = vmul.f32 %v502, %v532
        %v549 = vld [vmem:[%s3] sm:$0xf]
        %v550 = vld [vmem:[%s3 + $0x4] sm:$0xf]
        %v551 = vld [vmem:[%s3 + $0x8] sm:$0xf]
        %v552 = vld [vmem:[%s3 + $0xc] sm:$0xf]
        %v553 = vpack.c.bf16 %v535, %v533
        %v554 = vpack.c.bf16 %v536, %v534
        %v555 = vpack.c.bf16 %v539, %v537
        %v556 = vpack.c.bf16 %v540, %v538
        %v557 = vpack.c.bf16 %v543, %v541
        %v558 = vpack.c.bf16 %v544, %v542
        %v559 = vpack.c.bf16 %v547, %v545
        %v560 = vpack.c.bf16 %v548, %v546
        %v561 = vld [vmem:[%s4] sm:$0xff]
        %v562 = vld [vmem:[%s4 + $0x8] sm:$0xff]
        %v563 = vld [vmem:[%s4 + $0x10] sm:$0xff]
        %v564 = vld [vmem:[%s4 + $0x18] sm:$0xff]
        %566 = vset.pattern.permute.xlu0 0
        %567 = vperm.xlu0 %566, %v561
        %v568 = vpop.permute.xlu0 %567
        %571 = vset.pattern.permute.xlu0 0
        %572 = vperm.xlu0 %571, %v562
        %v573 = vpop.permute.xlu0 %572
        %576 = vset.pattern.permute.xlu0 0
        %577 = vperm.xlu0 %576, %v563
        %v578 = vpop.permute.xlu0 %577
        %581 = vset.pattern.permute.xlu0 0
        %582 = vperm.xlu0 %581, %v564
        %v583 = vpop.permute.xlu0 %582
        %v589 = vunpack.c.l.b16 %v549
        %v590 = vunpack.c.l.b16 %v550
        %v591 = vunpack.c.l.b16 %v551
        %v592 = vunpack.c.l.b16 %v552
        %v593 = vpack.c.b16 %v590, %v589
        %v594 = vpack.c.b16 %v592, %v591
        %vm595 = vcmask 523264
        %v597 = vsel %vm595, %v593, 0
        %v600 = vsel %vm595, %v594, 0
        %602 = vmatpush.bf16.msra.mxu0 0
        %603 = vmatpush.bf16.msra.mxu0 0
        %604 = vmatpush.bf16.msra.mxu0 0
        %605 = vmatpush.bf16.msra.mxu0 0
        %606 = vmatpush.bf16.msra.mxu0 %v559
        %607 = vmatpush.bf16.msra.mxu0 %v557
        %608 = vmatpush.bf16.msra.mxu0 %v555
        %609 = vmatpush.bf16.msra.mxu0 %v553
        %610 = vmatmul.bf16.gmra.mxu0 %v597
        %v611 = vpop.f32.mrf.mxu0
        %v612 = vadd.f32 %v568, %v611
        %v613 = vpop.f32.mrf.mxu0
        %v614 = vadd.f32 %v573, %v613
        %615 = vmatmul.bf16.gmra.mxu0 %v600
        %v616 = vpop.f32.mrf.mxu0
        %v617 = vadd.f32 %v578, %v616
        %v618 = vpop.f32.mrf.mxu0
        %v619 = vadd.f32 %v583, %v618
        %620 = vdwg.mxu0
        %621 = vmatpush.bf16.msra.mxu0 0
        %622 = vmatpush.bf16.msra.mxu0 0
        %623 = vmatpush.bf16.msra.mxu0 0
        %624 = vmatpush.bf16.msra.mxu0 0
        %625 = vmatpush.bf16.msra.mxu0 %v560
        %626 = vmatpush.bf16.msra.mxu0 %v558
        %627 = vmatpush.bf16.msra.mxu0 %v556
        %628 = vmatpush.bf16.msra.mxu0 %v554
        %629 = vmatmul.bf16.gmra.mxu0 %v597
        %v630 = vpop.f32.mrf.mxu0
        %v631 = vadd.f32 %v568, %v630
        %v632 = vpop.f32.mrf.mxu0
        %v633 = vadd.f32 %v573, %v632
        %634 = vmatmul.bf16.gmra.mxu0 %v600
        %v635 = vpop.f32.mrf.mxu0
        %v636 = vadd.f32 %v578, %v635
        %v637 = vpop.f32.mrf.mxu0
        %v638 = vadd.f32 %v583, %v637
        %639 = vdwg.mxu0
        %v640 = vadd.f32 %v612, %v224
        %v641 = vadd.f32 %v631, %v225
        %v642 = vadd.f32 %v614, %v226
        %v643 = vadd.f32 %v633, %v227
        %v644 = vadd.f32 %v617, %v228
        %v645 = vadd.f32 %v636, %v229
        %v646 = vadd.f32 %v619, %v230
        %v647 = vadd.f32 %v638, %v231
        %v648 = vmax.f32 %v640, 0.0
        %v649 = vmax.f32 %v641, 0.0
        %v650 = vmax.f32 %v642, 0.0
        %v651 = vmax.f32 %v643, 0.0
        %v652 = vmax.f32 %v644, 0.0
        %v653 = vmax.f32 %v645, 0.0
        %v654 = vmax.f32 %v646, 0.0
        %v655 = vmax.f32 %v647, 0.0
        %656 = vst [vmem:[%s217] sm:$0xff] %v648
        %657 = vst [vmem:[%s217 + $0x8] sm:$0xff] %v649
        %658 = vst [vmem:[%s217 + $0x10] sm:$0xff] %v650
        %659 = vst [vmem:[%s217 + $0x18] sm:$0xff] %v651
        %660 = vst [vmem:[%s217 + $0x20] sm:$0xff] %v652
        %661 = vst [vmem:[%s217 + $0x28] sm:$0xff] %v653
        %662 = vst [vmem:[%s217 + $0x30] sm:$0xff] %v654
        %663 = vst [vmem:[%s217 + $0x38] sm:$0xff] %v655
        %s664 = sand.u32 %s137, 1
        %s665 = scalar_lea.sflag [#allocation3], %s664
        %s666 = sand.u32 %s137, 1
        %s667 = smul.addr %s666, 64
        %s668 = scalar_lea.vmem [#allocation2], %s667
        // Predicated region
        $region41: #{tpu_custom_call.1} parent=39 // pred_check
          %p669 = pneg %p147
        $region42: #{tpu_custom_call.1} parent=39 // pred_check_branch
          %671 = sbr.rel (%p669) target = $region44
        $region43: #{tpu_custom_call.1} parent=39 // pred_region
          %673 = vsyncadd %s665, 0
          %s674 = smul.addr %s19, 8
          %s675 = smul.addr %s674, 8
          %s676 = scalar_lea.hbm %s5, %s675
          %s677 = sshll.u32 %s668, 4
          %s678 = int_to_ptr.vmem [resolvable:$true] %s677
          %s679 = sshll.u32 %s676, 4
          %s680 = int_to_ptr.hbm [resolvable:$true] %s679
          %685 = dma.vmem_to_hbm [thread:$0]  %s678, 1024, %s680, %s665, 256, 256, 16
        $region44: #{tpu_custom_call.1} parent=39 // pred_fallthru
          _
      $region40: #{tpu_custom_call.1} parent=5 // pred_fallthru
        _
      %p686 = scmp.le.s32.totalorder 2, %s14
      // Predicated region
      $region45: #{tpu_custom_call.1} parent=5 // pred_check
        %p687 = pneg %p686
      $region46: #{tpu_custom_call.1} parent=5 // pred_check_branch
        %689 = sbr.rel (%p687) target = $region48
      $region47: #{tpu_custom_call.1} parent=5 // pred_region
        %s690 = ssub.s32 %s14, 2
        // Predicated region
        $region49: #{tpu_custom_call.1} parent=47 // pred_check
          %p691 = pneg %p153
        $region50: #{tpu_custom_call.1} parent=47 // pred_check_branch
          %693 = sbr.rel (%p691) target = $region52
        $region51: #{tpu_custom_call.1} parent=47 // pred_region
          %s694 = sand.u32 %s138, 1
          %s695 = scalar_lea.sflag [#allocation3], %s694
          %s696 = sand.u32 %s138, 1
          %s697 = smul.addr %s696, 64
          %s698 = scalar_lea.vmem [#allocation2], %s697
          %700 = dma.done %s695, 1024
        $region52: #{tpu_custom_call.1} parent=47 // pred_fallthru
          _
      $region48: #{tpu_custom_call.1} parent=5 // pred_fallthru
        _
    $region6: #{tpu_custom_call.1} parent=1 // loop_footer
      %s18 = sadd.s32 1, %s14
    $region7: #{tpu_custom_call.1} parent=1 // loop_footer_branch
      %13 = sbr.rel target = $region3
    $region8: #{tpu_custom_call.1} parent=1 // loop_exit
      _
    %701 = vsyncpa [#allocation3], 1
    %s702 = scalar_lea.sflag [#allocation3], 1
    %703 = vsyncpa %s702, 1

</llo_original>
